<compile_context>
chip_gen: v7x
topology: tpu7x:2x2x1
jax: 0.10.0
libtpu: 0.0.40
codegen_flags: <defaults>
</compile_context>

<pallas_src>
import jax
import jax.numpy as jnp
from jax.experimental import pallas as pl
from jax.experimental.pallas import tpu as pltpu


_LANE = 128                      # vreg lane width
_SUBLANE = 8                     # vreg sublanes (f32)
_PAD_GRAIN = _LANE * _SUBLANE    # 1024: minimum batch padding granularity
_MIN_TILE_N = _PAD_GRAIN         # smallest batch tile (1024 samples)
_MAX_TILE_N = 512 * 1024         # largest batch tile: 16 MiB double-buffered VMEM
_VMEM_LIMIT_BYTES = 48 * 1024 * 1024   # safe on v5e/v6e (128 MiB) and v7x (64 MiB)


def _round_up(x, m):
    return (x + m - 1) // m * m


def _choose_tile_n(padded_base):
    """Largest power-of-two tile (multiple of 1024) with >=2 grid steps and
    <= 12.5% extra padding; falls back to one 1024-sample tile for tiny N."""
    tile = _MAX_TILE_N
    while tile > _MIN_TILE_N:
        waste = _round_up(padded_base, tile) - padded_base
        if padded_base >= 2 * tile and waste * 8 <= padded_base:
            return tile
        tile //= 2
    return _MIN_TILE_N


def _linear_kernel(x_ref, w_ref, b_ref, o_ref):
    """o = sum_k w[k] * x[k] + b   on dense (S, 128) f32 slabs (pure VPU).

    x_ref: (in_f, S, 128) float32, VMEM   (batch on sublane+lane axes)
    w_ref: (in_f,)        float32, SMEM
    b_ref: (1,)           float32, SMEM
    o_ref: (S, 128)       float32, VMEM
    """
    in_f = x_ref.shape[0]
    acc = x_ref[0] * w_ref[0]
    for k in range(1, in_f):          # in_f == 3: statically unrolled
        acc = acc + x_ref[k] * w_ref[k]
    o_ref[...] = (acc + b_ref[0]).astype(o_ref.dtype)


def binary_classifier_forward(x, weight, bias):
    """Forward of BinaryClassifier: y = x @ W^T + b (nn.Linear(3, 1) semantics).

    Args:
      x:      (N, 3) float32
      weight: (1, 3) float32   (PyTorch convention: (out_features, in_features))
      bias:   (1,)   float32
    Returns:
      (N, 1) float32
    """
    n, in_f = x.shape
    out_f = weight.shape[0]
    if out_f != 1 or weight.shape[1] != in_f:
        # Kernel is specialized to the module's nn.Linear(in_f, 1); refuse to be
        # silently wrong for other shapes.
        raise ValueError("binary_classifier_forward expects weight of shape (1, in_features)")

    # Batch padding: only up to a multiple of 1024, then (if needed) up to a
    # multiple of the chosen tile (bounded to <=12.5% extra by _choose_tile_n).
    base = _round_up(n, _PAD_GRAIN)
    tile_n = _choose_tile_n(base)
    padded_n = _round_up(base, tile_n)

    # Feature-major, batch mapped onto (sublane, lane): (in_f, padded_n//128, 128).
    # Under jit, transpose + pad + reshape fuse into one XLA pass.
    x_t = x.T
    if padded_n != n:
        x_t = jnp.pad(x_t, ((0, 0), (0, padded_n - n)))
    x3 = x_t.reshape(in_f, padded_n // _LANE, _LANE)

    w_vec = weight.reshape(in_f)     # (3,) -> SMEM scalars
    b_vec = bias.reshape(out_f)      # (1,) -> SMEM scalar

    sub_tile = tile_n // _LANE       # multiple of 8 by construction
    grid = (padded_n // tile_n,)

    out2d = pl.pallas_call(
        _linear_kernel,
        out_shape=jax.ShapeDtypeStruct((padded_n // _LANE, _LANE), x.dtype),
        grid_spec=pltpu.PrefetchScalarGridSpec(
            num_scalar_prefetch=0,
            grid=grid,
            in_specs=[
                pl.BlockSpec((in_f, sub_tile, _LANE), lambda i: (0, i, 0)),
                pl.BlockSpec(memory_space=pltpu.MemorySpace.SMEM),
                pl.BlockSpec(memory_space=pltpu.MemorySpace.SMEM),
            ],
            out_specs=pl.BlockSpec((sub_tile, _LANE), lambda i: (i, 0)),
        ),
        compiler_params=pltpu.CompilerParams(
            dimension_semantics=("parallel",),        # independent batch tiles -> dual-TC on v7x
            vmem_limit_bytes=_VMEM_LIMIT_BYTES,
            allow_input_fusion=[True, False, False],  # let XLA fuse transpose/pad into the x operand
        ),
    )(x3, w_vec, b_vec)

    # Drop batch padding and return in PyTorch layout (N, 1); reshape is free,
    # the slice is a small copy.
    return out2d.reshape(padded_n, 1)[:n]


if __name__ == "__main__":
    key = jax.random.PRNGKey(0)
    k_x, k_w, k_b, k_x2, k_x3 = jax.random.split(key, 5)

    # nn.Linear(3, 1) with PyTorch-style uniform(-1/sqrt(fan_in), 1/sqrt(fan_in)) init.
    in_features, out_features = 3, 1
    bound = 1.0 / jnp.sqrt(jnp.float32(in_features))
    weight = jax.random.uniform(
        k_w, (out_features, in_features), jnp.float32, -bound, bound
    )
    bias = jax.random.uniform(k_b, (out_features,), jnp.float32, -bound, bound)

    fwd = jax.jit(binary_classifier_forward)

    # Small example input consistent with the forward: batch=8, features=3.
    x = jax.random.normal(k_x, (8, in_features), jnp.float32)
    out = fwd(x, weight, bias)
    jax.block_until_ready(out)
    ref = x @ weight.T + bias
    assert out.shape == (8, 1)
    assert jnp.allclose(out, ref, atol=1e-5, rtol=1e-5)

    # Batch not lane/sublane aligned (exercises the padding path).
    x2 = jax.random.normal(k_x2, (300, in_features), jnp.float32)
    out2 = fwd(x2, weight, bias)
    jax.block_until_ready(out2)
    ref2 = x2 @ weight.T + bias
    assert out2.shape == (300, 1)
    assert jnp.allclose(out2, ref2, atol=1e-5, rtol=1e-5)

    # Batch large enough for a multi-step ("parallel") grid (3 tiles of 1024).
    x3_in = jax.random.normal(k_x3, (2500, in_features), jnp.float32)
    out3 = fwd(x3_in, weight, bias)
    jax.block_until_ready(out3)
    ref3 = x3_in @ weight.T + bias
    assert out3.shape == (2500, 1)
    assert jnp.allclose(out3, ref3, atol=1e-5, rtol=1e-5)

    print("KERNEL_OK")
</pallas_src>

<mosaic_0001>
module attributes {stable_mosaic.version = 11 : i64} {
  func.func @_linear_kernel(%arg0: i32, %arg1: memref<3x8x128xf32, #tpu.memory_space<vmem>>, %arg2: memref<3xf32, #tpu.memory_space<smem>>, %arg3: memref<1xf32, #tpu.memory_space<smem>>, %arg4: memref<8x128xf32, #tpu.memory_space<vmem>>) attributes {dimension_semantics = [#tpu.dimension_semantics<parallel>], iteration_bounds = array<i64: 1>, scalar_prefetch = 0 : i64, scratch_operands = 0 : i64, tpu.core_type = #tpu.core_type<tc>, window_params = [{transform_indices = @transform_0, window_bounds = array<i64: 3, 8, 128>}, {transform_indices = @transform_1, window_bounds = array<i64: 3>}, {transform_indices = @transform_2, window_bounds = array<i64: 1>}, {transform_indices = @transform_3, window_bounds = array<i64: 8, 128>}]} {
    %c0 = arith.constant 0 : index
    %c0_0 = arith.constant 0 : index
    %c0_1 = arith.constant 0 : index
    %0 = vector.load %arg1[%c0, %c0_0, %c0_1] : memref<3x8x128xf32, #tpu.memory_space<vmem>>, vector<1x8x128xf32>
    %1 = vector.shape_cast %0 : vector<1x8x128xf32> to vector<8x128xf32>
    %c0_2 = arith.constant 0 : index
    %2 = memref.load %arg2[%c0_2] : memref<3xf32, #tpu.memory_space<smem>>
    %3 = vector.broadcast %2 : f32 to vector<8x128xf32>
    %4 = arith.mulf %1, %3 : vector<8x128xf32>
    %c1 = arith.constant 1 : index
    %c0_3 = arith.constant 0 : index
    %c0_4 = arith.constant 0 : index
    %5 = vector.load %arg1[%c1, %c0_3, %c0_4] : memref<3x8x128xf32, #tpu.memory_space<vmem>>, vector<1x8x128xf32>
    %6 = vector.shape_cast %5 : vector<1x8x128xf32> to vector<8x128xf32>
    %c1_5 = arith.constant 1 : index
    %7 = memref.load %arg2[%c1_5] : memref<3xf32, #tpu.memory_space<smem>>
    %8 = vector.broadcast %7 : f32 to vector<8x128xf32>
    %9 = arith.mulf %6, %8 : vector<8x128xf32>
    %10 = arith.addf %4, %9 : vector<8x128xf32>
    %c2 = arith.constant 2 : index
    %c0_6 = arith.constant 0 : index
    %c0_7 = arith.constant 0 : index
    %11 = vector.load %arg1[%c2, %c0_6, %c0_7] : memref<3x8x128xf32, #tpu.memory_space<vmem>>, vector<1x8x128xf32>
    %12 = vector.shape_cast %11 : vector<1x8x128xf32> to vector<8x128xf32>
    %c2_8 = arith.constant 2 : index
    %13 = memref.load %arg2[%c2_8] : memref<3xf32, #tpu.memory_space<smem>>
    %14 = vector.broadcast %13 : f32 to vector<8x128xf32>
    %15 = arith.mulf %12, %14 : vector<8x128xf32>
    %16 = arith.addf %10, %15 : vector<8x128xf32>
    %c0_9 = arith.constant 0 : index
    %17 = memref.load %arg3[%c0_9] : memref<1xf32, #tpu.memory_space<smem>>
    %18 = vector.broadcast %17 : f32 to vector<8x128xf32>
    %19 = arith.addf %16, %18 : vector<8x128xf32>
    %c0_10 = arith.constant 0 : index
    %c0_11 = arith.constant 0 : index
    %20 = vector.load %arg4[%c0_10, %c0_11] : memref<8x128xf32, #tpu.memory_space<vmem>>, vector<8x128xf32>
    tpu.vector_store %arg4[%c0_10, %c0_11], %19 {strides = array<i32>} : memref<8x128xf32, #tpu.memory_space<vmem>>, vector<8x128xf32>,
    return
  }
  func.func @transform_0(%arg0: i32) -> (i32, i32, i32) {
    %c0_i32 = arith.constant 0 : i32
    %c0_i32_0 = arith.constant 0 : i32
    %c0_i32_1 = arith.constant 0 : i32
    return %c0_i32, %arg0, %c0_i32_0 : i32, i32, i32
  }
  func.func @transform_1(%arg0: i32) -> i32 {
    %c0_i32 = arith.constant 0 : i32
    %c0_i32_0 = arith.constant 0 : i32
    return %c0_i32 : i32
  }
  func.func @transform_2(%arg0: i32) -> i32 {
    %c0_i32 = arith.constant 0 : i32
    %c0_i32_0 = arith.constant 0 : i32
    return %c0_i32 : i32
  }
  func.func @transform_3(%arg0: i32) -> (i32, i32) {
    %c0_i32 = arith.constant 0 : i32
    %c0_i32_0 = arith.constant 0 : i32
    return %arg0, %c0_i32 : i32, i32
  }
}

</mosaic_0001>

<llo_original>
// kernel: binary_classifier_forward.2
$region0: #{binary_classifier_forward.2}
  #allocation0 [shape = 'u32[]', space=smem, size = 0x4, offset = 0x4, fixed_abs, tag = 'smem constant byte address 0x4 - core index']
  #allocation1 [shape = 'u32[144,128]{1,0:T(1,128)}', space=vmem, size = 0x12000, scoped, tag = 'internal scratch']
  #allocation2 [shape = 'f32[1]{0:T(128)S(6)}', space=smem, size = 0x200, scoped, tag = 'scoped memory for binary_classifier_forward.2']
  %s0 = inlined_call_operand.vmem [shape: f32[3], index: 0, kind: input, shape index: {}]
  %s1 = inlined_call_operand.<no memory space> [shape: f32[1], index: 1, kind: input, shape index: {}]
  %s2 = inlined_call_operand.vmem [shape: f32[1,3,8,128], index: 2, kind: input, shape index: {}]
  %s3 = inlined_call_operand.vmem [shape: f32[8,128], index: 3, kind: output, shape index: {}]
  %s4 = sld [smem:[#allocation0]]
  $region26: #{binary_classifier_forward.2} parent=0
    _
  %s6 = ssub.s32 1, %s4
  %s7 = scalar_select 0, %s6, %s4
  %8 = sst [smem:[#allocation2]] %s1
  $region1: #{binary_classifier_forward.2} parent=0
    #allocation3 [shape = 'u8[512]{0}', space=smem, size = 0x200, scoped, tag = 'input window, operand 1, single buffered']
    #allocation4 [shape = 's32[1]{0}', space=sflag, size = 0x4, scoped, tag = 'scoped memory for binary_classifier_forward.2']
    #allocation5 [shape = 'u8[12288]{0}', space=vmem, size = 0x3000, dematerialized = true, scoped, tag = 'FusionAdapter Buffer %fusion.1 = f32[3,8,128]{2,1,0:T(8,128)} fusion(%param_2.1), kind=kLoop, calls=%fused_computation.2.clone, metadata={op_name="jit(binary_classifier_forward)/reshape" stack_frame_id=9}']
    %9 = vsyncpa [#allocation4], 0
    // Predicated region
    $region2: #{binary_classifier_forward.2} parent=1 // pred_check
      _
    $region3: #{binary_classifier_forward.2} parent=1 // pred_check_branch
      %11 = sbr.rel (0) target = $region5
    $region4: #{binary_classifier_forward.2} parent=1 // pred_region
      _
    $region5: #{binary_classifier_forward.2} parent=1 // pred_fallthru
      _
    // Predicated region
    $region6: #{binary_classifier_forward.2} parent=1 // pred_check
      _
    $region7: #{binary_classifier_forward.2} parent=1 // pred_check_branch
      %13 = sbr.rel (0) target = $region9
    $region8: #{binary_classifier_forward.2} parent=1 // pred_region
      %s15 = ssub.s32 16, 16
      %16 = vsyncadd [#allocation4], %s15
      %s18 = sshll.u32 %s0, 4
      %s19 = int_to_ptr.vmem [resolvable:$true] %s18
      %21 = dma.vmem_to_smem %s19, 16, [#allocation3], [#allocation4]
    $region9: #{binary_classifier_forward.2} parent=1 // pred_fallthru
      _
    // Predicated region
    $region10: #{binary_classifier_forward.2} parent=1 // pred_check
      _
    $region11: #{binary_classifier_forward.2} parent=1 // pred_check_branch
      %23 = sbr.rel (0) target = $region13
    $region12: #{binary_classifier_forward.2} parent=1 // pred_region
      _
    $region13: #{binary_classifier_forward.2} parent=1 // pred_fallthru
      _
    // Predicated region
    $region14: #{binary_classifier_forward.2} parent=1 // pred_check
      _
    $region15: #{binary_classifier_forward.2} parent=1 // pred_check_branch
      %25 = sbr.rel (0) target = $region17
    $region16: #{binary_classifier_forward.2} parent=1 // pred_region
      %26 = dma.done [#allocation4], 16
    $region17: #{binary_classifier_forward.2} parent=1 // pred_fallthru
      _
    %27 = sfence
    %v28 = vld [vmem:[%s2] sm:$0xff]
    %30 = vst [vmem:[#allocation5] sm:$0xff] %v28
    %s31 = scalar_lea.vmem %s2, 8
    %v32 = vld [vmem:[%s31] sm:$0xff]
    %s33 = scalar_lea.vmem [#allocation5], 8
    %35 = vst [vmem:[%s33] sm:$0xff] %v32
    %s36 = scalar_lea.vmem %s2, 16
    %v37 = vld [vmem:[%s36] sm:$0xff]
    %s38 = scalar_lea.vmem [#allocation5], 16
    %40 = vst [vmem:[%s38] sm:$0xff] %v37
    %v41 = vld [vmem:[#allocation5] sm:$0xff]
    %s42 = sld [smem:[#allocation3]]
    %v43 = vstv %s42
    %v44 = vmul.f32 %v41, %v43
    %s45 = scalar_lea.vmem [#allocation5], 8
    %v46 = vld [vmem:[%s45] sm:$0xff]
    %s47 = sld [smem:[#allocation3 + $0x1]]
    %v48 = vstv %s47
    %v49 = vmul.f32 %v46, %v48
    %v50 = vadd.f32 %v44, %v49
    %s51 = scalar_lea.vmem [#allocation5], 16
    %v52 = vld [vmem:[%s51] sm:$0xff]
    %s53 = sld [smem:[#allocation3 + $0x2]]
    %v54 = vstv %s53
    %v55 = vmul.f32 %v52, %v54
    %v56 = vadd.f32 %v50, %v55
    %s57 = sld [smem:[#allocation2]]
    %v58 = vstv %s57
    %v59 = vadd.f32 %v56, %v58
    %60 = vst [vmem:[%s3] sm:$0xff] %v59
    // Predicated region
    $region18: #{binary_classifier_forward.2} parent=1 // pred_check
      _
    $region19: #{binary_classifier_forward.2} parent=1 // pred_check_branch
      %62 = sbr.rel (0) target = $region21
    $region20: #{binary_classifier_forward.2} parent=1 // pred_region
      _
    $region21: #{binary_classifier_forward.2} parent=1 // pred_fallthru
      _
    // Predicated region
    $region22: #{binary_classifier_forward.2} parent=1 // pred_check
      _
    $region23: #{binary_classifier_forward.2} parent=1 // pred_check_branch
      %64 = sbr.rel (0) target = $region25
    $region24: #{binary_classifier_forward.2} parent=1 // pred_region
      _
    $region25: #{binary_classifier_forward.2} parent=1 // pred_fallthru
      _
    %65 = vsyncpa [#allocation4], 1

</llo_original>
